<compile_context>
chip_gen: v7x
topology: tpu7x:2x2x1
jax: 0.10.0
libtpu: 0.0.40
codegen_flags: <defaults>
</compile_context>

<pallas_src>
import functools

import jax
import jax.numpy as jnp
from jax import lax
from jax.experimental import pallas as pl
from jax.experimental.pallas import tpu as pltpu


def _moe_kernel(x_ref, wg_ref, bg_ref, w1p_ref, b1p_ref, w2_ref, b2p_ref, out_ref,
                *, num_experts_chosen):
    N = x_ref.shape[0]                       # tokens in this block (= batches_in_block * T)
    E = wg_ref.shape[1]                      # num experts (== T, see module note)
    H = w2_ref.shape[1]
    O = w2_ref.shape[2]
    T = E
    BB = N // T                              # batches in this block

    x = x_ref[...]                           # (N, D)

    # ---- Router gate: one lane-dense matmul + softmax over experts ----------
    logits = jnp.dot(x, wg_ref[...], preferred_element_type=jnp.float32)
    logits = logits + bg_ref[...]                                   # (N, E)
    logits = logits - jnp.max(logits, axis=-1, keepdims=True)
    expd = jnp.exp(logits)
    gating = expd / jnp.sum(expd, axis=-1, keepdims=True)           # softmax, (N, E)

    # ---- top-k mask (k is a static Python int: unrolled argmax-and-mask) ----
    col = lax.broadcasted_iota(jnp.int32, (N, E), 1)
    selected = jnp.zeros((N, E), dtype=jnp.bool_)
    for _ in range(num_experts_chosen):
        masked = jnp.where(selected, -jnp.inf, gating)
        m = jnp.max(masked, axis=-1, keepdims=True)
        cand = jnp.where(masked == m, col, E)                       # first occurrence of max
        first = jnp.min(cand, axis=-1, keepdims=True)
        selected = jnp.logical_or(selected, col == first)

    gated = gating * selected.astype(gating.dtype)
    # F.normalize(p=1, dim=2): x / max(||x||_1, 1e-12)
    denom = jnp.maximum(jnp.sum(jnp.abs(gated), axis=-1, keepdims=True), 1e-12)
    gates = gated / denom                                           # (N, E)

    # ---- Expert first layer: single fused MXU matmul over all experts -------
    h = jnp.dot(x, w1p_ref[...], preferred_element_type=jnp.float32)
    h = jnp.maximum(h + b1p_ref[...], 0.0)                          # (N, E*H), ReLU

    # ---- Weighted combine, gating contracted BEFORE W2 ----------------------
    #   out[b, j, :] = sum_e gates[b, j, e] * (h_j[b, e, :] @ W2[j] + b2[j])
    #               = (sum_e gates[b, j, e] * h_j[b, e, :]) @ W2[j]
    #                 + (sum_e gates[b, j, e]) * b2[j]
    gates3 = gates.reshape(BB, T, E)                                # gates3[b, out_row, token]
    gsum = jnp.sum(gates3, axis=-1)                                 # (BB, T)

    for j in range(E):                                              # E is small & static
        g_j = gates3[:, j, :]                                       # (BB, E) token weights
        h_j = h[:, j * H:(j + 1) * H].reshape(BB, T, H)             # expert j hidden states
        p_j = jnp.sum(g_j[:, :, None] * h_j, axis=1)                # (BB, H) gated reduce
        row_j = jnp.dot(p_j, w2_ref[j], preferred_element_type=jnp.float32)   # (BB, O)
        row_j = row_j + gsum[:, j:j + 1] * b2p_ref[j:j + 1, :]
        # Direct static-slice store into the lane-dense (BB, T*O) output slab.
        out_ref[:, j * O:(j + 1) * O] = row_j.astype(out_ref.dtype)


def mixtral_moe(x, params, num_experts_chosen, *, batch_block=None):
    Wg, bg, W1, b1, W2, b2 = params
    B, T, D = x.shape
    E = Wg.shape[1]
    H = W1.shape[2]
    O = W2.shape[2]
    # The reference PyTorch einsum is only well-formed when T == E.
    assert T == E, "forward as written requires seq_len == num_experts"
    assert 0 < num_experts_chosen <= E

    if batch_block is None:
        batch_block = B                 # fold the whole batch into one grid step
    assert B % batch_block == 0
    nb = B // batch_block
    n_tok = batch_block * T             # tokens per grid step (matmul M dimension)

    # Pack weights lane-dense in the wrapper (one-time XLA work, not per step).
    W1p = jnp.transpose(W1, (1, 0, 2)).reshape(D, E * H)    # (D, E*H)
    b1p = b1.reshape(1, E * H)
    b2p = b2.reshape(E, O)
    x2 = x.reshape(B * T, D)

    kernel = functools.partial(_moe_kernel, num_experts_chosen=num_experts_chosen)

    # Weight BlockSpecs use constant index maps (fully VMEM-resident across the
    # grid); at toy sizes this is far below any VMEM limit.
    out2 = pl.pallas_call(
        kernel,
        out_shape=jax.ShapeDtypeStruct((B, T * O), x.dtype),
        grid=(nb,),
        in_specs=[
            pl.BlockSpec((n_tok, D), lambda i: (i, 0)),      # x  (all tokens of the block)
            pl.BlockSpec((D, E), lambda i: (0, 0)),          # router weight
            pl.BlockSpec((1, E), lambda i: (0, 0)),          # router bias
            pl.BlockSpec((D, E * H), lambda i: (0, 0)),      # packed expert W1
            pl.BlockSpec((1, E * H), lambda i: (0, 0)),      # packed expert b1
            pl.BlockSpec((E, H, O), lambda i: (0, 0, 0)),    # expert W2 (stacked)
            pl.BlockSpec((E, O), lambda i: (0, 0)),          # expert b2
        ],
        out_specs=pl.BlockSpec((batch_block, T * O), lambda i: (i, 0)),
        compiler_params=pltpu.CompilerParams(dimension_semantics=("parallel",)),
    )(x2, Wg, bg, W1p, b1p, W2, b2p)

    return out2.reshape(B, T, O)


def reference_moe(x, params, num_experts_chosen):
    """Pure-JAX mirror of the PyTorch forward for validation."""
    Wg, bg, W1, b1, W2, b2 = params
    E = Wg.shape[1]
    logits = jnp.einsum('btd,de->bte', x, Wg) + bg[None]
    gating = jax.nn.softmax(logits, axis=-1)
    _, topi = lax.top_k(gating, num_experts_chosen)
    mask = jnp.sum(jax.nn.one_hot(topi, E, dtype=gating.dtype), axis=-2)
    gated = gating * mask
    gates = gated / jnp.maximum(jnp.sum(jnp.abs(gated), -1, keepdims=True), 1e-12)
    h = jax.nn.relu(jnp.einsum('btd,edh->beth', x, W1) + b1[None])
    y = jnp.einsum('beth,eho->beto', h, W2) + b2[None]          # (B, E, T, O)
    stacked = jnp.transpose(y, (0, 2, 1, 3))                    # torch.stack(dim=2)
    transposed = jnp.swapaxes(stacked, 1, 2)                    # .transpose(1, 2)
    return jnp.einsum('bte,bteo->bto', gates, transposed)


if __name__ == "__main__":
    B, T, D, H, O, E = 2, 4, 32, 64, 32, 4     # T == E (see note above)
    num_experts_chosen = 2

    key = jax.random.PRNGKey(0)
    kx, k1, k2, k3, k4, k5, k6 = jax.random.split(key, 7)
    x = jax.random.normal(kx, (B, T, D), jnp.float32)
    Wg = jax.random.normal(k1, (D, E), jnp.float32) / (D ** 0.5)
    bg = jax.random.normal(k2, (1, E), jnp.float32) * 0.01
    W1 = jax.random.normal(k3, (E, D, H), jnp.float32) / (D ** 0.5)
    b1 = jax.random.normal(k4, (E, 1, H), jnp.float32) * 0.01
    W2 = jax.random.normal(k5, (E, H, O), jnp.float32) / (H ** 0.5)
    b2 = jax.random.normal(k6, (E, 1, O), jnp.float32) * 0.01
    params = (Wg, bg, W1, b1, W2, b2)

    out = mixtral_moe(x, params, num_experts_chosen)
    jax.block_until_ready(out)

    ref = reference_moe(x, params, num_experts_chosen)
    assert out.shape == (B, T, O)
    assert jnp.allclose(out, ref, rtol=1e-4, atol=1e-4), "Pallas kernel mismatch vs reference"
    print("KERNEL_OK")
</pallas_src>

<mosaic_0001>
module attributes {stable_mosaic.version = 11 : i64} {
  func.func @_moe_kernel(%arg0: i32, %arg1: memref<8x32xf32, #tpu.memory_space<vmem>>, %arg2: memref<32x4xf32, #tpu.memory_space<vmem>>, %arg3: memref<1x4xf32, #tpu.memory_space<vmem>>, %arg4: memref<32x256xf32, #tpu.memory_space<vmem>>, %arg5: memref<1x256xf32, #tpu.memory_space<vmem>>, %arg6: memref<4x64x32xf32, #tpu.memory_space<vmem>>, %arg7: memref<4x32xf32, #tpu.memory_space<vmem>>, %arg8: memref<2x128xf32, #tpu.memory_space<vmem>>) attributes {dimension_semantics = [#tpu.dimension_semantics<parallel>], iteration_bounds = array<i64: 1>, scalar_prefetch = 0 : i64, scratch_operands = 0 : i64, tpu.core_type = #tpu.core_type<tc>, window_params = [{transform_indices = @transform_0, window_bounds = array<i64: 8, 32>}, {pipeline_mode = #tpu.pipeline_mode<synchronous>, transform_indices = @transform_1, window_bounds = array<i64: 32, 4>}, {pipeline_mode = #tpu.pipeline_mode<synchronous>, transform_indices = @transform_2, window_bounds = array<i64: 1, 4>}, {pipeline_mode = #tpu.pipeline_mode<synchronous>, transform_indices = @transform_3, window_bounds = array<i64: 32, 256>}, {pipeline_mode = #tpu.pipeline_mode<synchronous>, transform_indices = @transform_4, window_bounds = array<i64: 1, 256>}, {pipeline_mode = #tpu.pipeline_mode<synchronous>, transform_indices = @transform_5, window_bounds = array<i64: 4, 64, 32>}, {pipeline_mode = #tpu.pipeline_mode<synchronous>, transform_indices = @transform_6, window_bounds = array<i64: 4, 32>}, {transform_indices = @transform_7, window_bounds = array<i64: 2, 128>}]} {
    %c0 = arith.constant 0 : index
    %c0_0 = arith.constant 0 : index
    %0 = vector.load %arg1[%c0, %c0_0] : memref<8x32xf32, #tpu.memory_space<vmem>>, vector<8x32xf32>
    %c0_1 = arith.constant 0 : index
    %c0_2 = arith.constant 0 : index
    %1 = vector.load %arg2[%c0_1, %c0_2] : memref<32x4xf32, #tpu.memory_space<vmem>>, vector<32x4xf32>
    %cst = arith.constant dense<0.000000e+00> : vector<8x4xf32>
    %2 = tpu.matmul %0, %1, %cst {dimension_numbers = #tpu.dot_dimension_numbers<[1], [0], [0], [1], [0, 0, 1, 1], [], []>} : vector<8x32xf32>, vector<32x4xf32>, vector<8x4xf32> -> vector<8x4xf32>
    %c0_3 = arith.constant 0 : index
    %c0_4 = arith.constant 0 : index
    %3 = vector.load %arg3[%c0_3, %c0_4] : memref<1x4xf32, #tpu.memory_space<vmem>>, vector<1x4xf32>
    %4 = vector.broadcast %3 : vector<1x4xf32> to vector<8x4xf32>
    %5 = arith.addf %2, %4 : vector<8x4xf32>
    %cst_5 = arith.constant dense<0xFF800000> : vector<8xf32>
    %6 = vector.multi_reduction <maximumf>, %5, %cst_5 [1] : vector<8x4xf32> to vector<8xf32>
    %7 = vector.shape_cast %6 : vector<8xf32> to vector<8x1xf32>
    %8 = vector.broadcast %7 : vector<8x1xf32> to vector<8x4xf32>
    %9 = arith.subf %5, %8 : vector<8x4xf32>
    %10 = math.exp %9 : vector<8x4xf32>
    %cst_6 = arith.constant dense<0.000000e+00> : vector<8xf32>
    %11 = vector.multi_reduction <add>, %10, %cst_6 [1] : vector<8x4xf32> to vector<8xf32>
    %12 = vector.shape_cast %11 : vector<8xf32> to vector<8x1xf32>
    %13 = vector.broadcast %12 : vector<8x1xf32> to vector<8x4xf32>
    %14 = arith.divf %10, %13 : vector<8x4xf32>
    %15 = tpu.iota {dimensions = array<i32: 1>} : vector<8x4xi32>
    %false = arith.constant false
    %16 = vector.broadcast %false : i1 to vector<8x4xi1>
    %cst_7 = arith.constant 0xFF800000 : f32
    %17 = vector.broadcast %cst_7 : f32 to vector<8x4xf32>
    %18 = arith.select %16, %17, %14 : vector<8x4xi1>, vector<8x4xf32>
    %cst_8 = arith.constant dense<0xFF800000> : vector<8xf32>
    %19 = vector.multi_reduction <maximumf>, %18, %cst_8 [1] : vector<8x4xf32> to vector<8xf32>
    %20 = vector.shape_cast %19 : vector<8xf32> to vector<8x1xf32>
    %21 = vector.broadcast %20 : vector<8x1xf32> to vector<8x4xf32>
    %22 = arith.cmpf oeq, %18, %21 : vector<8x4xf32>
    %c4_i32 = arith.constant 4 : i32
    %23 = vector.broadcast %c4_i32 : i32 to vector<8x4xi32>
    %24 = arith.select %22, %15, %23 : vector<8x4xi1>, vector<8x4xi32>
    %cst_9 = arith.constant dense<2147483647> : vector<8xi32>
    %25 = vector.multi_reduction <minsi>, %24, %cst_9 [1] : vector<8x4xi32> to vector<8xi32>
    %26 = vector.shape_cast %25 : vector<8xi32> to vector<8x1xi32>
    %27 = vector.broadcast %26 : vector<8x1xi32> to vector<8x4xi32>
    %28 = arith.cmpi eq, %15, %27 : vector<8x4xi32>
    %29 = arith.ori %16, %28 : vector<8x4xi1>
    %cst_10 = arith.constant 0xFF800000 : f32
    %30 = vector.broadcast %cst_10 : f32 to vector<8x4xf32>
    %31 = arith.select %29, %30, %14 : vector<8x4xi1>, vector<8x4xf32>
    %cst_11 = arith.constant dense<0xFF800000> : vector<8xf32>
    %32 = vector.multi_reduction <maximumf>, %31, %cst_11 [1] : vector<8x4xf32> to vector<8xf32>
    %33 = vector.shape_cast %32 : vector<8xf32> to vector<8x1xf32>
    %34 = vector.broadcast %33 : vector<8x1xf32> to vector<8x4xf32>
    %35 = arith.cmpf oeq, %31, %34 : vector<8x4xf32>
    %c4_i32_12 = arith.constant 4 : i32
    %36 = vector.broadcast %c4_i32_12 : i32 to vector<8x4xi32>
    %37 = arith.select %35, %15, %36 : vector<8x4xi1>, vector<8x4xi32>
    %cst_13 = arith.constant dense<2147483647> : vector<8xi32>
    %38 = vector.multi_reduction <minsi>, %37, %cst_13 [1] : vector<8x4xi32> to vector<8xi32>
    %39 = vector.shape_cast %38 : vector<8xi32> to vector<8x1xi32>
    %40 = vector.broadcast %39 : vector<8x1xi32> to vector<8x4xi32>
    %41 = arith.cmpi eq, %15, %40 : vector<8x4xi32>
    %42 = arith.ori %29, %41 : vector<8x4xi1>
    %43 = arith.extui %42 : vector<8x4xi1> to vector<8x4xi32>
    %44 = arith.sitofp %43 : vector<8x4xi32> to vector<8x4xf32>
    %45 = arith.mulf %14, %44 : vector<8x4xf32>
    %46 = math.absf %45 : vector<8x4xf32>
    %cst_14 = arith.constant dense<0.000000e+00> : vector<8xf32>
    %47 = vector.multi_reduction <add>, %46, %cst_14 [1] : vector<8x4xf32> to vector<8xf32>
    %48 = vector.shape_cast %47 : vector<8xf32> to vector<8x1xf32>
    %cst_15 = arith.constant 9.99999996E-13 : f32
    %49 = vector.broadcast %cst_15 : f32 to vector<8x1xf32>
    %50 = arith.maximumf %48, %49 : vector<8x1xf32>
    %51 = vector.broadcast %50 : vector<8x1xf32> to vector<8x4xf32>
    %52 = arith.divf %45, %51 : vector<8x4xf32>
    %c0_16 = arith.constant 0 : index
    %c0_17 = arith.constant 0 : index
    %53 = vector.load %arg4[%c0_16, %c0_17] : memref<32x256xf32, #tpu.memory_space<vmem>>, vector<32x256xf32>
    %cst_18 = arith.constant dense<0.000000e+00> : vector<8x256xf32>
    %54 = tpu.matmul %0, %53, %cst_18 {dimension_numbers = #tpu.dot_dimension_numbers<[1], [0], [0], [1], [0, 0, 1, 1], [], []>} : vector<8x32xf32>, vector<32x256xf32>, vector<8x256xf32> -> vector<8x256xf32>
    %c0_19 = arith.constant 0 : index
    %c0_20 = arith.constant 0 : index
    %55 = vector.load %arg5[%c0_19, %c0_20] : memref<1x256xf32, #tpu.memory_space<vmem>>, vector<1x256xf32>
    %56 = vector.broadcast %55 : vector<1x256xf32> to vector<8x256xf32>
    %57 = arith.addf %54, %56 : vector<8x256xf32>
    %cst_21 = arith.constant 0.000000e+00 : f32
    %58 = vector.broadcast %cst_21 : f32 to vector<8x256xf32>
    %59 = arith.maximumf %57, %58 : vector<8x256xf32>
    %60 = vector.shape_cast %52 : vector<8x4xf32> to vector<2x4x4xf32>
    %cst_22 = arith.constant dense<0.000000e+00> : vector<2x4xf32>
    %61 = vector.multi_reduction <add>, %60, %cst_22 [2] : vector<2x4x4xf32> to vector<2x4xf32>
    %62 = vector.extract_strided_slice %60 {offsets = [0, 0, 0], sizes = [2, 1, 4], strides = [1, 1, 1]} : vector<2x4x4xf32> to vector<2x1x4xf32>
    %63 = vector.shape_cast %62 : vector<2x1x4xf32> to vector<2x4xf32>
    %64 = vector.extract_strided_slice %59 {offsets = [0, 0], sizes = [8, 64], strides = [1, 1]} : vector<8x256xf32> to vector<8x64xf32>
    %65 = vector.shape_cast %64 : vector<8x64xf32> to vector<2x4x64xf32>
    %66 = vector.shape_cast %63 : vector<2x4xf32> to vector<2x4x1xf32>
    %67 = vector.broadcast %66 : vector<2x4x1xf32> to vector<2x4x64xf32>
    %68 = arith.mulf %67, %65 : vector<2x4x64xf32>
    %cst_23 = arith.constant dense<0.000000e+00> : vector<2x64xf32>
    %69 = vector.multi_reduction <add>, %68, %cst_23 [1] : vector<2x4x64xf32> to vector<2x64xf32>
    %c0_24 = arith.constant 0 : index
    %c0_25 = arith.constant 0 : index
    %c0_26 = arith.constant 0 : index
    %70 = vector.load %arg6[%c0_24, %c0_25, %c0_26] : memref<4x64x32xf32, #tpu.memory_space<vmem>>, vector<1x64x32xf32>
    %71 = vector.shape_cast %70 : vector<1x64x32xf32> to vector<64x32xf32>
    %cst_27 = arith.constant dense<0.000000e+00> : vector<2x32xf32>
    %72 = tpu.matmul %69, %71, %cst_27 {dimension_numbers = #tpu.dot_dimension_numbers<[1], [0], [0], [1], [0, 0, 1, 1], [], []>} : vector<2x64xf32>, vector<64x32xf32>, vector<2x32xf32> -> vector<2x32xf32>
    %73 = vector.extract_strided_slice %61 {offsets = [0, 0], sizes = [2, 1], strides = [1, 1]} : vector<2x4xf32> to vector<2x1xf32>
    %c0_28 = arith.constant 0 : index
    %c0_29 = arith.constant 0 : index
    %74 = vector.load %arg7[%c0_28, %c0_29] : memref<4x32xf32, #tpu.memory_space<vmem>>, vector<1x32xf32>
    %75 = vector.broadcast %73 : vector<2x1xf32> to vector<2x32xf32>
    %76 = vector.broadcast %74 : vector<1x32xf32> to vector<2x32xf32>
    %77 = arith.mulf %75, %76 : vector<2x32xf32>
    %78 = arith.addf %72, %77 : vector<2x32xf32>
    %c0_30 = arith.constant 0 : index
    %c0_31 = arith.constant 0 : index
    %79 = vector.load %arg8[%c0_30, %c0_31] : memref<2x128xf32, #tpu.memory_space<vmem>>, vector<2x32xf32>
    tpu.vector_store %arg8[%c0_30, %c0_31], %78 {strides = array<i32>} : memref<2x128xf32, #tpu.memory_space<vmem>>, vector<2x32xf32>,
    %80 = vector.extract_strided_slice %60 {offsets = [0, 1, 0], sizes = [2, 1, 4], strides = [1, 1, 1]} : vector<2x4x4xf32> to vector<2x1x4xf32>
    %81 = vector.shape_cast %80 : vector<2x1x4xf32> to vector<2x4xf32>
    %82 = vector.extract_strided_slice %59 {offsets = [0, 64], sizes = [8, 64], strides = [1, 1]} : vector<8x256xf32> to vector<8x64xf32>
    %83 = vector.shape_cast %82 : vector<8x64xf32> to vector<2x4x64xf32>
    %84 = vector.shape_cast %81 : vector<2x4xf32> to vector<2x4x1xf32>
    %85 = vector.broadcast %84 : vector<2x4x1xf32> to vector<2x4x64xf32>
    %86 = arith.mulf %85, %83 : vector<2x4x64xf32>
    %cst_32 = arith.constant dense<0.000000e+00> : vector<2x64xf32>
    %87 = vector.multi_reduction <add>, %86, %cst_32 [1] : vector<2x4x64xf32> to vector<2x64xf32>
    %c1 = arith.constant 1 : index
    %c0_33 = arith.constant 0 : index
    %c0_34 = arith.constant 0 : index
    %88 = vector.load %arg6[%c1, %c0_33, %c0_34] : memref<4x64x32xf32, #tpu.memory_space<vmem>>, vector<1x64x32xf32>
    %89 = vector.shape_cast %88 : vector<1x64x32xf32> to vector<64x32xf32>
    %cst_35 = arith.constant dense<0.000000e+00> : vector<2x32xf32>
    %90 = tpu.matmul %87, %89, %cst_35 {dimension_numbers = #tpu.dot_dimension_numbers<[1], [0], [0], [1], [0, 0, 1, 1], [], []>} : vector<2x64xf32>, vector<64x32xf32>, vector<2x32xf32> -> vector<2x32xf32>
    %91 = vector.extract_strided_slice %61 {offsets = [0, 1], sizes = [2, 1], strides = [1, 1]} : vector<2x4xf32> to vector<2x1xf32>
    %c1_36 = arith.constant 1 : index
    %c0_37 = arith.constant 0 : index
    %92 = vector.load %arg7[%c1_36, %c0_37] : memref<4x32xf32, #tpu.memory_space<vmem>>, vector<1x32xf32>
    %93 = vector.broadcast %91 : vector<2x1xf32> to vector<2x32xf32>
    %94 = vector.broadcast %92 : vector<1x32xf32> to vector<2x32xf32>
    %95 = arith.mulf %93, %94 : vector<2x32xf32>
    %96 = arith.addf %90, %95 : vector<2x32xf32>
    %c0_38 = arith.constant 0 : index
    %c32 = arith.constant 32 : index
    %97 = vector.load %arg8[%c0_38, %c32] : memref<2x128xf32, #tpu.memory_space<vmem>>, vector<2x32xf32>
    tpu.vector_store %arg8[%c0_38, %c32], %96 {strides = array<i32>} : memref<2x128xf32, #tpu.memory_space<vmem>>, vector<2x32xf32>,
    %98 = vector.extract_strided_slice %60 {offsets = [0, 2, 0], sizes = [2, 1, 4], strides = [1, 1, 1]} : vector<2x4x4xf32> to vector<2x1x4xf32>
    %99 = vector.shape_cast %98 : vector<2x1x4xf32> to vector<2x4xf32>
    %100 = vector.extract_strided_slice %59 {offsets = [0, 128], sizes = [8, 64], strides = [1, 1]} : vector<8x256xf32> to vector<8x64xf32>
    %101 = vector.shape_cast %100 : vector<8x64xf32> to vector<2x4x64xf32>
    %102 = vector.shape_cast %99 : vector<2x4xf32> to vector<2x4x1xf32>
    %103 = vector.broadcast %102 : vector<2x4x1xf32> to vector<2x4x64xf32>
    %104 = arith.mulf %103, %101 : vector<2x4x64xf32>
    %cst_39 = arith.constant dense<0.000000e+00> : vector<2x64xf32>
    %105 = vector.multi_reduction <add>, %104, %cst_39 [1] : vector<2x4x64xf32> to vector<2x64xf32>
    %c2 = arith.constant 2 : index
    %c0_40 = arith.constant 0 : index
    %c0_41 = arith.constant 0 : index
    %106 = vector.load %arg6[%c2, %c0_40, %c0_41] : memref<4x64x32xf32, #tpu.memory_space<vmem>>, vector<1x64x32xf32>
    %107 = vector.shape_cast %106 : vector<1x64x32xf32> to vector<64x32xf32>
    %cst_42 = arith.constant dense<0.000000e+00> : vector<2x32xf32>
    %108 = tpu.matmul %105, %107, %cst_42 {dimension_numbers = #tpu.dot_dimension_numbers<[1], [0], [0], [1], [0, 0, 1, 1], [], []>} : vector<2x64xf32>, vector<64x32xf32>, vector<2x32xf32> -> vector<2x32xf32>
    %109 = vector.extract_strided_slice %61 {offsets = [0, 2], sizes = [2, 1], strides = [1, 1]} : vector<2x4xf32> to vector<2x1xf32>
    %c2_43 = arith.constant 2 : index
    %c0_44 = arith.constant 0 : index
    %110 = vector.load %arg7[%c2_43, %c0_44] : memref<4x32xf32, #tpu.memory_space<vmem>>, vector<1x32xf32>
    %111 = vector.broadcast %109 : vector<2x1xf32> to vector<2x32xf32>
    %112 = vector.broadcast %110 : vector<1x32xf32> to vector<2x32xf32>
    %113 = arith.mulf %111, %112 : vector<2x32xf32>
    %114 = arith.addf %108, %113 : vector<2x32xf32>
    %c0_45 = arith.constant 0 : index
    %c64 = arith.constant 64 : index
    %115 = vector.load %arg8[%c0_45, %c64] : memref<2x128xf32, #tpu.memory_space<vmem>>, vector<2x32xf32>
    tpu.vector_store %arg8[%c0_45, %c64], %114 {strides = array<i32>} : memref<2x128xf32, #tpu.memory_space<vmem>>, vector<2x32xf32>,
    %116 = vector.extract_strided_slice %60 {offsets = [0, 3, 0], sizes = [2, 1, 4], strides = [1, 1, 1]} : vector<2x4x4xf32> to vector<2x1x4xf32>
    %117 = vector.shape_cast %116 : vector<2x1x4xf32> to vector<2x4xf32>
    %118 = vector.extract_strided_slice %59 {offsets = [0, 192], sizes = [8, 64], strides = [1, 1]} : vector<8x256xf32> to vector<8x64xf32>
    %119 = vector.shape_cast %118 : vector<8x64xf32> to vector<2x4x64xf32>
    %120 = vector.shape_cast %117 : vector<2x4xf32> to vector<2x4x1xf32>
    %121 = vector.broadcast %120 : vector<2x4x1xf32> to vector<2x4x64xf32>
    %122 = arith.mulf %121, %119 : vector<2x4x64xf32>
    %cst_46 = arith.constant dense<0.000000e+00> : vector<2x64xf32>
    %123 = vector.multi_reduction <add>, %122, %cst_46 [1] : vector<2x4x64xf32> to vector<2x64xf32>
    %c3 = arith.constant 3 : index
    %c0_47 = arith.constant 0 : index
    %c0_48 = arith.constant 0 : index
    %124 = vector.load %arg6[%c3, %c0_47, %c0_48] : memref<4x64x32xf32, #tpu.memory_space<vmem>>, vector<1x64x32xf32>
    %125 = vector.shape_cast %124 : vector<1x64x32xf32> to vector<64x32xf32>
    %cst_49 = arith.constant dense<0.000000e+00> : vector<2x32xf32>
    %126 = tpu.matmul %123, %125, %cst_49 {dimension_numbers = #tpu.dot_dimension_numbers<[1], [0], [0], [1], [0, 0, 1, 1], [], []>} : vector<2x64xf32>, vector<64x32xf32>, vector<2x32xf32> -> vector<2x32xf32>
    %127 = vector.extract_strided_slice %61 {offsets = [0, 3], sizes = [2, 1], strides = [1, 1]} : vector<2x4xf32> to vector<2x1xf32>
    %c3_50 = arith.constant 3 : index
    %c0_51 = arith.constant 0 : index
    %128 = vector.load %arg7[%c3_50, %c0_51] : memref<4x32xf32, #tpu.memory_space<vmem>>, vector<1x32xf32>
    %129 = vector.broadcast %127 : vector<2x1xf32> to vector<2x32xf32>
    %130 = vector.broadcast %128 : vector<1x32xf32> to vector<2x32xf32>
    %131 = arith.mulf %129, %130 : vector<2x32xf32>
    %132 = arith.addf %126, %131 : vector<2x32xf32>
    %c0_52 = arith.constant 0 : index
    %c96 = arith.constant 96 : index
    %133 = vector.load %arg8[%c0_52, %c96] : memref<2x128xf32, #tpu.memory_space<vmem>>, vector<2x32xf32>
    tpu.vector_store %arg8[%c0_52, %c96], %132 {strides = array<i32>} : memref<2x128xf32, #tpu.memory_space<vmem>>, vector<2x32xf32>,
    return
  }
  func.func @transform_0(%arg0: i32) -> (i32, i32) {
    %c0_i32 = arith.constant 0 : i32
    %c0_i32_0 = arith.constant 0 : i32
    return %arg0, %c0_i32 : i32, i32
  }
  func.func @transform_1(%arg0: i32) -> (i32, i32) {
    %c0_i32 = arith.constant 0 : i32
    %c0_i32_0 = arith.constant 0 : i32
    %c0_i32_1 = arith.constant 0 : i32
    return %c0_i32, %c0_i32_0 : i32, i32
  }
  func.func @transform_2(%arg0: i32) -> (i32, i32) {
    %c0_i32 = arith.constant 0 : i32
    %c0_i32_0 = arith.constant 0 : i32
    %c0_i32_1 = arith.constant 0 : i32
    return %c0_i32, %c0_i32_0 : i32, i32
  }
  func.func @transform_3(%arg0: i32) -> (i32, i32) {
    %c0_i32 = arith.constant 0 : i32
    %c0_i32_0 = arith.constant 0 : i32
    %c0_i32_1 = arith.constant 0 : i32
    return %c0_i32, %c0_i32_0 : i32, i32
  }
  func.func @transform_4(%arg0: i32) -> (i32, i32) {
    %c0_i32 = arith.constant 0 : i32
    %c0_i32_0 = arith.constant 0 : i32
    %c0_i32_1 = arith.constant 0 : i32
    return %c0_i32, %c0_i32_0 : i32, i32
  }
  func.func @transform_5(%arg0: i32) -> (i32, i32, i32) {
    %c0_i32 = arith.constant 0 : i32
    %c0_i32_0 = arith.constant 0 : i32
    %c0_i32_1 = arith.constant 0 : i32
    %c0_i32_2 = arith.constant 0 : i32
    return %c0_i32, %c0_i32_0, %c0_i32_1 : i32, i32, i32
  }
  func.func @transform_6(%arg0: i32) -> (i32, i32) {
    %c0_i32 = arith.constant 0 : i32
    %c0_i32_0 = arith.constant 0 : i32
    %c0_i32_1 = arith.constant 0 : i32
    return %c0_i32, %c0_i32_0 : i32, i32
  }
  func.func @transform_7(%arg0: i32) -> (i32, i32) {
    %c0_i32 = arith.constant 0 : i32
    %c0_i32_0 = arith.constant 0 : i32
    return %arg0, %c0_i32 : i32, i32
  }
}

</mosaic_0001>

<llo_original>
// kernel: tpu_custom_call.1
$region0: #{tpu_custom_call.1}
  #allocation0 [shape = 'u32[]', space=smem, size = 0x4, offset = 0x4, fixed_abs, tag = 'smem constant byte address 0x4 - core index']
  #allocation1 [shape = 'u32[144,128]{1,0:T(1,128)}', space=vmem, size = 0x12000, scoped, tag = 'internal scratch']
  %s0 = inlined_call_operand.vmem [shape: f32[8,32], index: 0, kind: input, shape index: {}]
  %s1 = inlined_call_operand.vmem [shape: f32[32,4], index: 1, kind: input, shape index: {}]
  %s2 = inlined_call_operand.vmem [shape: f32[1,4], index: 2, kind: input, shape index: {}]
  %s3 = inlined_call_operand.vmem [shape: f32[32,256], index: 3, kind: input, shape index: {}]
  %s4 = inlined_call_operand.vmem [shape: f32[1,256], index: 4, kind: input, shape index: {}]
  %s5 = inlined_call_operand.vmem [shape: f32[4,64,32], index: 5, kind: input, shape index: {}]
  %s6 = inlined_call_operand.vmem [shape: f32[4,32], index: 6, kind: input, shape index: {}]
  %s7 = inlined_call_operand.hbm [shape: f32[2,128], index: 7, kind: output, shape index: {}]
  %s8 = sld [smem:[#allocation0]]
  $region38: #{tpu_custom_call.1} parent=0
    _
  %s10 = ssub.s32 1, %s8
  %s11 = scalar_select 0, %s10, %s8
  $region1: #{tpu_custom_call.1} parent=0
    #allocation2 [shape = 'u8[1024]{0}', space=vmem, size = 0x400, scoped, tag = 'output window, operand 0, single buffered']
    #allocation3 [shape = 's32[1]{0}', space=sflag, size = 0x4, scoped, tag = 'scoped memory for tpu_custom_call.1']
    %12 = vsyncpa [#allocation3], 0
    // Predicated region
    $region2: #{tpu_custom_call.1} parent=1 // pred_check
      _
    $region3: #{tpu_custom_call.1} parent=1 // pred_check_branch
      %14 = sbr.rel (0) target = $region5
    $region4: #{tpu_custom_call.1} parent=1 // pred_region
      _
    $region5: #{tpu_custom_call.1} parent=1 // pred_fallthru
      _
    // Predicated region
    $region6: #{tpu_custom_call.1} parent=1 // pred_check
      _
    $region7: #{tpu_custom_call.1} parent=1 // pred_check_branch
      %16 = sbr.rel (0) target = $region9
    $region8: #{tpu_custom_call.1} parent=1 // pred_region
      _
    $region9: #{tpu_custom_call.1} parent=1 // pred_fallthru
      _
    // Predicated region
    $region10: #{tpu_custom_call.1} parent=1 // pred_check
      _
    $region11: #{tpu_custom_call.1} parent=1 // pred_check_branch
      %18 = sbr.rel (0) target = $region13
    $region12: #{tpu_custom_call.1} parent=1 // pred_region
      _
    $region13: #{tpu_custom_call.1} parent=1 // pred_fallthru
      _
    // Predicated region
    $region14: #{tpu_custom_call.1} parent=1 // pred_check
      _
    $region15: #{tpu_custom_call.1} parent=1 // pred_check_branch
      %20 = sbr.rel (0) target = $region17
    $region16: #{tpu_custom_call.1} parent=1 // pred_region
      _
    $region17: #{tpu_custom_call.1} parent=1 // pred_fallthru
      _
    // Predicated region
    $region18: #{tpu_custom_call.1} parent=1 // pred_check
      _
    $region19: #{tpu_custom_call.1} parent=1 // pred_check_branch
      %22 = sbr.rel (0) target = $region21
    $region20: #{tpu_custom_call.1} parent=1 // pred_region
      _
    $region21: #{tpu_custom_call.1} parent=1 // pred_fallthru
      _
    // Predicated region
    $region22: #{tpu_custom_call.1} parent=1 // pred_check
      _
    $region23: #{tpu_custom_call.1} parent=1 // pred_check_branch
      %24 = sbr.rel (0) target = $region25
    $region24: #{tpu_custom_call.1} parent=1 // pred_region
      _
    $region25: #{tpu_custom_call.1} parent=1 // pred_fallthru
      _
    // Predicated region
    $region26: #{tpu_custom_call.1} parent=1 // pred_check
      _
    $region27: #{tpu_custom_call.1} parent=1 // pred_check_branch
      %26 = sbr.rel (0) target = $region29
    $region28: #{tpu_custom_call.1} parent=1 // pred_region
      _
    $region29: #{tpu_custom_call.1} parent=1 // pred_fallthru
      _
    %v27 = vld [vmem:[%s0] sm:$0xff]
    %v28 = vld [vmem:[%s1] sm:$0xff]
    %v29 = vld [vmem:[%s1 + $0x8] sm:$0xff]
    %v30 = vld [vmem:[%s1 + $0x10] sm:$0xff]
    %v31 = vld [vmem:[%s1 + $0x18] sm:$0xff]
    %v32 = vld [vmem:[%s2] sm:$0x1]
    %v34 = vlaneseq
    %v35 = vshrl.u32 %v34, 7
    %v36 = vsub.s32 0, %v35
    %v37 = vrot.slane %v32, %v36
    %vm39 = vcmask 261120
    %v41 = vsel %vm39, %v27, 0
    %43 = vmatprep.subr.mxu0 0.0
    %44 = vmatpush1.msra.mxu0 %v28
    %45 = vmatprep.subr.mxu0 0.0
    %46 = vmatpush1.msra.mxu0 %v29
    %47 = vmatprep.subr.mxu0 0.0
    %48 = vmatpush1.msra.mxu0 %v30
    %49 = vmatprep.subr.mxu0 0.0
    %50 = vmatpush1.msra.mxu0 %v31
    %51 = vmatprep.subr.mxu0 0.0
    %52 = vmatpush1.msra.mxu0 0.0
    %53 = vmatprep.subr.mxu0 0.0
    %54 = vmatpush1.msra.mxu0 0.0
    %55 = vmatprep.subr.mxu0 0.0
    %56 = vmatpush1.msra.mxu0 0.0
    %57 = vmatprep.subr.mxu0 0.0
    %58 = vmatpush1.msra.mxu0 0.0
    %59 = vmatprep.subr.mxu0 0.0
    %60 = vmatpush1.msra.mxu0 0.0
    %61 = vmatprep.subr.mxu0 0.0
    %62 = vmatpush1.msra.mxu0 0.0
    %63 = vmatprep.subr.mxu0 0.0
    %64 = vmatpush1.msra.mxu0 0.0
    %65 = vmatprep.subr.mxu0 0.0
    %66 = vmatpush1.msra.mxu0 0.0
    %67 = vmatprep.subr.mxu0 0.0
    %68 = vmatpush1.msra.mxu0 0.0
    %69 = vmatprep.subr.mxu0 0.0
    %70 = vmatpush1.msra.mxu0 0.0
    %71 = vmatprep.subr.mxu0 0.0
    %72 = vmatpush1.msra.mxu0 0.0
    %73 = vmatprep.subr.mxu0 0.0
    %74 = vmatpush1.msra.mxu0 0.0
    %75 = vmatprep.subr.mxu0 0.0
    %76 = vmatpush1.msra.mxu0 0.0
    %77 = vmatprep.subr.mxu0 0.0
    %78 = vmatpush1.msra.mxu0 0.0
    %79 = vmatprep.subr.mxu0 0.0
    %80 = vmatpush1.msra.mxu0 0.0
    %81 = vmatprep.subr.mxu0 0.0
    %82 = vmatpush1.msra.mxu0 0.0
    %83 = vmatprep.subr.mxu0 0.0
    %84 = vmatpush1.msra.mxu0 0.0
    %85 = vmatprep.subr.mxu0 0.0
    %86 = vmatpush1.msra.mxu0 0.0
    %87 = vmatprep.subr.mxu0 0.0
    %88 = vmatpush1.msra.mxu0 0.0
    %89 = vmatprep.subr.mxu0 0.0
    %90 = vmatpush1.msra.mxu0 0.0
    %91 = vmatprep.subr.mxu0 0.0
    %92 = vmatpush1.msra.mxu0 0.0
    %93 = vmatprep.subr.mxu0 0.0
    %94 = vmatpush1.msra.mxu0 0.0
    %95 = vmatprep.subr.mxu0 0.0
    %96 = vmatpush1.msra.mxu0 0.0
    %97 = vmatprep.subr.mxu0 0.0
    %98 = vmatpush1.msra.mxu0 0.0
    %99 = vmatprep.subr.mxu0 0.0
    %100 = vmatpush1.msra.mxu0 0.0
    %101 = vmatprep.subr.mxu0 0.0
    %102 = vmatpush1.msra.mxu0 0.0
    %103 = vmatprep.subr.mxu0 0.0
    %104 = vmatpush1.msra.mxu0 0.0
    %105 = vmatprep.subr.mxu0 0.0
    %106 = vmatpush1.msra.mxu0 0.0
    %107 = vmatprep.mubr.f32.mxu0 0.0
    %108 = vmatmul.mubr.f32.gmra.mrb[0].mxu0 %v41
    %v109 = vpop.f32.mrb[0].mxu0
    %v110 = vadd.f32 %v37, %v109
    %v111 = vpop.f32.mrb[0].mxu0
    %112 = vdwg.mxu0
    %vm113 = vcmask 31744
    %v114 = vsel %vm113, %v110, -inf
    %115 = vmax.xlane.f32.xlu0 %v114
    %v116 = vpop.xlane.xlu0 %115
    %v117 = vsub.f32 %v110, %v116
    %v118 = vmul.f32 %v117, 1.442695
    %v119 = vpow.pop %v118
    %v120 = vsel %vm113, %v119, 0.0
    %121 = vadd.xlane.f32.xlu0 %v120
    %v122 = vpop.xlane.xlu0 %121
    %v123 = vrcp.pop %v122
    %v124 = vmul.f32 %v119, %v123
    %v125 = vlaneseq
    %v126 = vand.u32 %v125, 127
    %v127 = vsel %vm113, %v124, -inf
    %128 = vmax.xlane.f32.xlu0 %v127
    %v129 = vpop.xlane.xlu0 %128
    %vm130 = vcmp.eq.f32.partialorder %v124, %v129
    %v131 = vsel %vm130, %v126, 4
    %v132 = vsel %vm113, %v131, 2147483647
    %v133 = vand.u32 %v132, 65535
    %v134 = vshra.s32 %v132, 16
    %v135 = vcvt.s32.f32 %v133
    %v136 = vcvt.s32.f32 %v134
    %137 = vmin.xlane.f32.xlu0 %v136
    %v138 = vpop.xlane.xlu0 %137
    %vm139 = vcmp.eq.f32.partialorder %v136, %v138
    %v140 = vsel %vm139, %v135, inf
    %141 = vmin.xlane.f32.xlu0 %v140
    %v142 = vpop.xlane.xlu0 %141
    %v143 = vcvt.f32.s32 %v142
    %v144 = vcvt.f32.s32 %v138
    %v145 = vshll.u32 %v144, 16
    %v146 = vadd.s32 %v145, %v143
    %vm147 = vcmp.eq.s32.totalorder %v126, %v146
    %v148 = vsel %vm147, -inf, %v124
    %v149 = vsel %vm113, %v148, -inf
    %150 = vmax.xlane.f32.xlu0 %v149
    %v151 = vpop.xlane.xlu0 %150
    %vm152 = vcmp.eq.f32.partialorder %v148, %v151
    %v153 = vsel %vm152, %v126, 4
    %v154 = vsel %vm113, %v153, 2147483647
    %v155 = vand.u32 %v154, 65535
    %v156 = vshra.s32 %v154, 16
    %v157 = vcvt.s32.f32 %v155
    %v158 = vcvt.s32.f32 %v156
    %159 = vmin.xlane.f32.xlu0 %v158
    %v160 = vpop.xlane.xlu0 %159
    %vm161 = vcmp.eq.f32.partialorder %v158, %v160
    %v162 = vsel %vm161, %v157, inf
    %163 = vmin.xlane.f32.xlu0 %v162
    %v164 = vpop.xlane.xlu0 %163
    %v165 = vcvt.f32.s32 %v164
    %v166 = vcvt.f32.s32 %v160
    %v167 = vshll.u32 %v166, 16
    %v168 = vadd.s32 %v167, %v165
    %vm169 = vcmp.eq.s32.totalorder %v126, %v168
    %vm170 = vmor %vm147, %vm169
    %v171 = vsel %vm170, 1, 0
    %v172 = vcvt.s32.f32 %v171
    %v173 = vmul.f32 %v124, %v172
    %v174 = vand.u32 2147483647, %v173
    %v175 = vsel %vm113, %v174, 0.0
    %176 = vadd.xlane.f32.xlu0 %v175
    %v177 = vpop.xlane.xlu0 %176
    %v178 = vmax.f32 %v177, 1e-12
    %v179 = vrcp.pop %v178
    %v180 = vmul.f32 %v173, %v179
    %v181 = vld [vmem:[%s3] sm:$0xff]
    %v182 = vld [vmem:[%s3 + $0x8] sm:$0xff]
    %v183 = vld [vmem:[%s3 + $0x10] sm:$0xff]
    %v184 = vld [vmem:[%s3 + $0x18] sm:$0xff]
    %v185 = vld [vmem:[%s3 + $0x20] sm:$0xff]
    %v186 = vld [vmem:[%s3 + $0x28] sm:$0xff]
    %v187 = vld [vmem:[%s3 + $0x30] sm:$0xff]
    %v188 = vld [vmem:[%s3 + $0x38] sm:$0xff]
    %v189 = vld [vmem:[%s4] sm:$0x3]
    %v191 = vlaneseq
    %v192 = vshrl.u32 %v191, 7
    %v193 = vsub.s32 0, %v192
    %v194 = vrot.slane %v189, %v193
    %v195 = vlaneseq
    %v196 = vshrl.u32 %v195, 7
    %v197 = vsub.s32 1, %v196
    %v198 = vrot.slane %v189, %v197
    %201 = vmatprep.subr.mxu0 %v182
    %202 = vmatpush1.msra.mxu0 %v181
    %203 = vmatprep.subr.mxu0 %v184
    %204 = vmatpush1.msra.mxu0 %v183
    %205 = vmatprep.subr.mxu0 %v186
    %206 = vmatpush1.msra.mxu0 %v185
    %207 = vmatprep.subr.mxu0 %v188
    %208 = vmatpush1.msra.mxu0 %v187
    %209 = vmatprep.subr.mxu0 0.0
    %210 = vmatpush1.msra.mxu0 0.0
    %211 = vmatprep.subr.mxu0 0.0
    %212 = vmatpush1.msra.mxu0 0.0
    %213 = vmatprep.subr.mxu0 0.0
    %214 = vmatpush1.msra.mxu0 0.0
    %215 = vmatprep.subr.mxu0 0.0
    %216 = vmatpush1.msra.mxu0 0.0
    %217 = vmatprep.subr.mxu0 0.0
    %218 = vmatpush1.msra.mxu0 0.0
    %219 = vmatprep.subr.mxu0 0.0
    %220 = vmatpush1.msra.mxu0 0.0
    %221 = vmatprep.subr.mxu0 0.0
    %222 = vmatpush1.msra.mxu0 0.0
    %223 = vmatprep.subr.mxu0 0.0
    %224 = vmatpush1.msra.mxu0 0.0
    %225 = vmatprep.subr.mxu0 0.0
    %226 = vmatpush1.msra.mxu0 0.0
    %227 = vmatprep.subr.mxu0 0.0
    %228 = vmatpush1.msra.mxu0 0.0
    %229 = vmatprep.subr.mxu0 0.0
    %230 = vmatpush1.msra.mxu0 0.0
    %231 = vmatprep.subr.mxu0 0.0
    %232 = vmatpush1.msra.mxu0 0.0
    %233 = vmatprep.subr.mxu0 0.0
    %234 = vmatpush1.msra.mxu0 0.0
    %235 = vmatprep.subr.mxu0 0.0
    %236 = vmatpush1.msra.mxu0 0.0
    %237 = vmatprep.subr.mxu0 0.0
    %238 = vmatpush1.msra.mxu0 0.0
    %239 = vmatprep.subr.mxu0 0.0
    %240 = vmatpush1.msra.mxu0 0.0
    %241 = vmatprep.subr.mxu0 0.0
    %242 = vmatpush1.msra.mxu0 0.0
    %243 = vmatprep.subr.mxu0 0.0
    %244 = vmatpush1.msra.mxu0 0.0
    %245 = vmatprep.subr.mxu0 0.0
    %246 = vmatpush1.msra.mxu0 0.0
    %247 = vmatprep.subr.mxu0 0.0
    %248 = vmatpush1.msra.mxu0 0.0
    %249 = vmatprep.subr.mxu0 0.0
    %250 = vmatpush1.msra.mxu0 0.0
    %251 = vmatprep.subr.mxu0 0.0
    %252 = vmatpush1.msra.mxu0 0.0
    %253 = vmatprep.subr.mxu0 0.0
    %254 = vmatpush1.msra.mxu0 0.0
    %255 = vmatprep.subr.mxu0 0.0
    %256 = vmatpush1.msra.mxu0 0.0
    %257 = vmatprep.subr.mxu0 0.0
    %258 = vmatpush1.msra.mxu0 0.0
    %259 = vmatprep.subr.mxu0 0.0
    %260 = vmatpush1.msra.mxu0 0.0
    %261 = vmatprep.subr.mxu0 0.0
    %262 = vmatpush1.msra.mxu0 0.0
    %263 = vmatprep.subr.mxu0 0.0
    %264 = vmatpush1.msra.mxu0 0.0
    %265 = vmatprep.mubr.f32.mxu0 0.0
    %266 = vmatmul.mubr.f32.gmra.mrb[0].mxu0 %v41
    %v267 = vpop.f32.mrb[0].mxu0
    %v268 = vadd.f32 %v194, %v267
    %v269 = vpop.f32.mrb[0].mxu0
    %v270 = vadd.f32 %v198, %v269
    %271 = vdwg.mxu0
    %v272 = vmax.f32 %v268, 0.0
    %v273 = vmax.f32 %v270, 0.0
    %v275 = vcombine.high %v180, %v180
    %vm277 = vcmask 27648
    %v278 = vsel %vm277, %v180, 0.0
    %279 = vadd.xlane.f32.xlu0 %v278
    %v280 = vpop.xlane.xlu0 %279
    %v281 = vsel %vm277, %v275, 0.0
    %282 = vadd.xlane.f32.xlu0 %v281
    %v283 = vpop.xlane.xlu0 %282
    %v285 = vcombine.high %v272, %v272
    %v287 = vlaneseq
    %v288 = vshrl.u32 %v287, 7
    %v289 = vsub.s32 0, %v288
    %v290 = vrot.slane %v180, %v289
    %292 = vbcast.lane.b32.xlu0 %v290, 256
    %v293 = vpop.permute.xlu0 %292
    %v294 = vlaneseq
    %v295 = vshrl.u32 %v294, 7
    %v296 = vsub.s32 0, %v295
    %v297 = vrot.slane %v275, %v296
    %299 = vbcast.lane.b32.xlu0 %v297, 256
    %v300 = vpop.permute.xlu0 %299
    %v301 = vmul.f32 %v293, %v272
    %v302 = vmul.f32 %v300, %v285
    %vm303 = vcmask 519168
    %v304 = vsel %vm303, %v301, 0.0
    %v305 = vrot.slane %v304, 4
    %v306 = vadd.f32 %v304, %v305
    %v307 = vrot.slane %v306, 2
    %v308 = vadd.f32 %v306, %v307
    %v309 = vrot.slane %v308, 1
    %v310 = vadd.f32 %v308, %v309
    %v311 = vsel %vm303, %v302, 0.0
    %v312 = vrot.slane %v311, 4
    %v313 = vadd.f32 %v311, %v312
    %v314 = vrot.slane %v313, 2
    %v315 = vadd.f32 %v313, %v314
    %v316 = vrot.slane %v315, 1
    %v317 = vadd.f32 %v315, %v316
    %v318 = vld [vmem:[%s5] sm:$0xff]
    %v319 = vld [vmem:[%s5 + $0x8] sm:$0xff]
    %v320 = vld [vmem:[%s5 + $0x10] sm:$0xff]
    %v321 = vld [vmem:[%s5 + $0x18] sm:$0xff]
    %v322 = vld [vmem:[%s5 + $0x20] sm:$0xff]
    %v323 = vld [vmem:[%s5 + $0x28] sm:$0xff]
    %v324 = vld [vmem:[%s5 + $0x30] sm:$0xff]
    %v325 = vld [vmem:[%s5 + $0x38] sm:$0xff]
    %v326 = vld [vmem:[%s6] sm:$0x1]
    %v327 = vlaneseq
    %v328 = vshrl.u32 %v327, 7
    %v329 = vsub.s32 0, %v328
    %v330 = vrot.slane %v280, %v329
    %v331 = vlaneseq
    %v332 = vshrl.u32 %v331, 7
    %v333 = vsub.s32 0, %v332
    %v334 = vrot.slane %v283, %v333
    %v335 = vlaneseq
    %v336 = vshrl.u32 %v335, 7
    %v337 = vsub.s32 0, %v336
    %v338 = vrot.slane %v326, %v337
    %341 = vbcast.lane.b32.xlu0 %v338, 256
    %v342 = vpop.permute.xlu0 %341
    %s344 = sor.u32 256, 8
    %345 = vbcast.lane.b32.xlu0 %v338, %s344
    %v346 = vpop.permute.xlu0 %345
    %s348 = sor.u32 256, 16
    %349 = vbcast.lane.b32.xlu0 %v338, %s348
    %v350 = vpop.permute.xlu0 %349
    %s352 = sor.u32 256, 24
    %353 = vbcast.lane.b32.xlu0 %v338, %s352
    %v354 = vpop.permute.xlu0 %353
    %v359 = vmul.f32 %v330, %v342
    %v360 = vmul.f32 %v330, %v346
    %v361 = vmul.f32 %v330, %v350
    %v362 = vmul.f32 %v330, %v354
    %v363 = vmul.f32 %v334, %v342
    %v364 = vmul.f32 %v334, %v346
    %v365 = vmul.f32 %v334, %v350
    %v366 = vmul.f32 %v334, %v354
    %vm369 = vcmask 1041409
    %v370 = vsel %vm369, %v317, %v310
    %379 = vset.pattern.permute.xlu0 0
    %380 = vperm.xlu0 %379, %v359
    %v381 = vpop.permute.xlu0 %380
    %382 = vset.pattern.permute.xlu0 0
    %383 = vperm.xlu0 %382, %v360
    %v384 = vpop.permute.xlu0 %383
    %385 = vset.pattern.permute.xlu0 0
    %386 = vperm.xlu0 %385, %v361
    %v387 = vpop.permute.xlu0 %386
    %388 = vset.pattern.permute.xlu0 0
    %389 = vperm.xlu0 %388, %v362
    %v390 = vpop.permute.xlu0 %389
    %391 = vset.pattern.permute.xlu0 0
    %392 = vperm.xlu0 %391, %v363
    %v393 = vpop.permute.xlu0 %392
    %394 = vset.pattern.permute.xlu0 0
    %395 = vperm.xlu0 %394, %v364
    %v396 = vpop.permute.xlu0 %395
    %397 = vset.pattern.permute.xlu0 0
    %398 = vperm.xlu0 %397, %v365
    %v399 = vpop.permute.xlu0 %398
    %400 = vset.pattern.permute.xlu0 0
    %401 = vperm.xlu0 %400, %v366
    %v402 = vpop.permute.xlu0 %401
    %v403 = vlaneseq
    %v404 = vshrl.u32 %v403, 7
    %v405 = vsub.s32 %v126, %v404
    %v406 = vrot.slane %v381, %v405
    %v407 = vadd.s32 %v126, 4294967288
    %v408 = vlaneseq
    %v409 = vshrl.u32 %v408, 7
    %v410 = vsub.s32 %v407, %v409
    %v411 = vrot.slane %v384, %v410
    %vm412 = vcmask 130112
    %v413 = vsel %vm412, %v411, %v406
    %v414 = vadd.s32 %v126, 4294967280
    %v415 = vlaneseq
    %v416 = vshrl.u32 %v415, 7
    %v417 = vsub.s32 %v414, %v416
    %v418 = vrot.slane %v387, %v417
    %vm419 = vcmask 195712
    %v420 = vsel %vm419, %v418, %v413
    %v421 = vadd.s32 %v126, 4294967272
    %v422 = vlaneseq
    %v423 = vshrl.u32 %v422, 7
    %v424 = vsub.s32 %v421, %v423
    %v425 = vrot.slane %v390, %v424
    %vm426 = vcmask 261312
    %v427 = vsel %vm426, %v425, %v420
    %v428 = vlaneseq
    %v429 = vshrl.u32 %v428, 7
    %v430 = vsub.s32 %v126, %v429
    %v431 = vrot.slane %v393, %v430
    %v432 = vlaneseq
    %v433 = vshrl.u32 %v432, 7
    %v434 = vsub.s32 %v407, %v433
    %v435 = vrot.slane %v396, %v434
    %v436 = vsel %vm412, %v435, %v431
    %v437 = vlaneseq
    %v438 = vshrl.u32 %v437, 7
    %v439 = vsub.s32 %v414, %v438
    %v440 = vrot.slane %v399, %v439
    %v441 = vsel %vm419, %v440, %v436
    %v442 = vlaneseq
    %v443 = vshrl.u32 %v442, 7
    %v444 = vsub.s32 %v421, %v443
    %v445 = vrot.slane %v402, %v444
    %v446 = vsel %vm426, %v445, %v441
    %v447 = vsel %vm369, %v446, %v427
    %vm449 = vcmask 523264
    %v450 = vsel %vm449, %v370, 0
    %452 = vmatprep.subr.mxu0 0.0
    %453 = vmatpush1.msra.mxu0 %v318
    %454 = vmatprep.subr.mxu0 0.0
    %455 = vmatpush1.msra.mxu0 %v319
    %456 = vmatprep.subr.mxu0 0.0
    %457 = vmatpush1.msra.mxu0 %v320
    %458 = vmatprep.subr.mxu0 0.0
    %459 = vmatpush1.msra.mxu0 %v321
    %460 = vmatprep.subr.mxu0 0.0
    %461 = vmatpush1.msra.mxu0 %v322
    %462 = vmatprep.subr.mxu0 0.0
    %463 = vmatpush1.msra.mxu0 %v323
    %464 = vmatprep.subr.mxu0 0.0
    %465 = vmatpush1.msra.mxu0 %v324
    %466 = vmatprep.subr.mxu0 0.0
    %467 = vmatpush1.msra.mxu0 %v325
    %468 = vmatprep.subr.mxu0 0.0
    %469 = vmatpush1.msra.mxu0 0.0
    %470 = vmatprep.subr.mxu0 0.0
    %471 = vmatpush1.msra.mxu0 0.0
    %472 = vmatprep.subr.mxu0 0.0
    %473 = vmatpush1.msra.mxu0 0.0
    %474 = vmatprep.subr.mxu0 0.0
    %475 = vmatpush1.msra.mxu0 0.0
    %476 = vmatprep.subr.mxu0 0.0
    %477 = vmatpush1.msra.mxu0 0.0
    %478 = vmatprep.subr.mxu0 0.0
    %479 = vmatpush1.msra.mxu0 0.0
    %480 = vmatprep.subr.mxu0 0.0
    %481 = vmatpush1.msra.mxu0 0.0
    %482 = vmatprep.subr.mxu0 0.0
    %483 = vmatpush1.msra.mxu0 0.0
    %484 = vmatprep.subr.mxu0 0.0
    %485 = vmatpush1.msra.mxu0 0.0
    %486 = vmatprep.subr.mxu0 0.0
    %487 = vmatpush1.msra.mxu0 0.0
    %488 = vmatprep.subr.mxu0 0.0
    %489 = vmatpush1.msra.mxu0 0.0
    %490 = vmatprep.subr.mxu0 0.0
    %491 = vmatpush1.msra.mxu0 0.0
    %492 = vmatprep.subr.mxu0 0.0
    %493 = vmatpush1.msra.mxu0 0.0
    %494 = vmatprep.subr.mxu0 0.0
    %495 = vmatpush1.msra.mxu0 0.0
    %496 = vmatprep.subr.mxu0 0.0
    %497 = vmatpush1.msra.mxu0 0.0
    %498 = vmatprep.subr.mxu0 0.0
    %499 = vmatpush1.msra.mxu0 0.0
    %500 = vmatprep.subr.mxu0 0.0
    %501 = vmatpush1.msra.mxu0 0.0
    %502 = vmatprep.subr.mxu0 0.0
    %503 = vmatpush1.msra.mxu0 0.0
    %504 = vmatprep.subr.mxu0 0.0
    %505 = vmatpush1.msra.mxu0 0.0
    %506 = vmatprep.subr.mxu0 0.0
    %507 = vmatpush1.msra.mxu0 0.0
    %508 = vmatprep.subr.mxu0 0.0
    %509 = vmatpush1.msra.mxu0 0.0
    %510 = vmatprep.subr.mxu0 0.0
    %511 = vmatpush1.msra.mxu0 0.0
    %512 = vmatprep.subr.mxu0 0.0
    %513 = vmatpush1.msra.mxu0 0.0
    %514 = vmatprep.subr.mxu0 0.0
    %515 = vmatpush1.msra.mxu0 0.0
    %516 = vmatprep.mubr.f32.mxu0 0.0
    %517 = vmatmul.mubr.f32.gmra.mrb[0].mxu0 %v450
    %v518 = vpop.f32.mrb[0].mxu0
    %v519 = vadd.f32 %v447, %v518
    %v520 = vpop.f32.mrb[0].mxu0
    %521 = vdwg.mxu0
    %vm522 = vcmask 254976
    %523 = vst.msk [vmem:[#allocation2] sm:$0x3] %vm522, %v519
    %v524 = vlaneseq
    %v525 = vshrl.u32 %v524, 7
    %v526 = vsub.s32 1, %v525
    %v527 = vrot.slane %v180, %v526
    %529 = vbcast.lane.b32.xlu0 %v527, 256
    %v530 = vpop.permute.xlu0 %529
    %v531 = vlaneseq
    %v532 = vshrl.u32 %v531, 7
    %v533 = vsub.s32 1, %v532
    %v534 = vrot.slane %v275, %v533
    %536 = vbcast.lane.b32.xlu0 %v534, 256
    %v537 = vpop.permute.xlu0 %536
    %538 = vrot.lane.b32.xlu0 %v272, 64
    %v539 = vpop.permute.xlu0 %538
    %540 = vrot.lane.b32.xlu0 %v285, 64
    %v541 = vpop.permute.xlu0 %540
    %v544 = vmul.f32 %v530, %v539
    %v545 = vmul.f32 %v537, %v541
    %v546 = vsel %vm303, %v544, 0.0
    %v547 = vrot.slane %v546, 4
    %v548 = vadd.f32 %v546, %v547
    %v549 = vrot.slane %v548, 2
    %v550 = vadd.f32 %v548, %v549
    %v551 = vrot.slane %v550, 1
    %v552 = vadd.f32 %v550, %v551
    %v553 = vsel %vm303, %v545, 0.0
    %v554 = vrot.slane %v553, 4
    %v555 = vadd.f32 %v553, %v554
    %v556 = vrot.slane %v555, 2
    %v557 = vadd.f32 %v555, %v556
    %v558 = vrot.slane %v557, 1
    %v559 = vadd.f32 %v557, %v558
    %s560 = scalar_lea.vmem %s5, 64
    %v561 = vld [vmem:[%s560] sm:$0xff]
    %v562 = vld [vmem:[%s560 + $0x8] sm:$0xff]
    %v563 = vld [vmem:[%s560 + $0x10] sm:$0xff]
    %v564 = vld [vmem:[%s560 + $0x18] sm:$0xff]
    %v565 = vld [vmem:[%s560 + $0x20] sm:$0xff]
    %v566 = vld [vmem:[%s560 + $0x28] sm:$0xff]
    %v567 = vld [vmem:[%s560 + $0x30] sm:$0xff]
    %v568 = vld [vmem:[%s560 + $0x38] sm:$0xff]
    %v569 = vld [vmem:[%s6 + $0x1] sm:$0x1]
    %v570 = vlaneseq
    %v571 = vshrl.u32 %v570, 7
    %v572 = vsub.s32 1, %v571
    %v573 = vrot.slane %v280, %v572
    %v574 = vlaneseq
    %v575 = vshrl.u32 %v574, 7
    %v576 = vsub.s32 1, %v575
    %v577 = vrot.slane %v283, %v576
    %v578 = vlaneseq
    %v579 = vshrl.u32 %v578, 7
    %v580 = vsub.s32 0, %v579
    %v581 = vrot.slane %v569, %v580
    %584 = vbcast.lane.b32.xlu0 %v581, 256
    %v585 = vpop.permute.xlu0 %584
    %s587 = sor.u32 256, 8
    %588 = vbcast.lane.b32.xlu0 %v581, %s587
    %v589 = vpop.permute.xlu0 %588
    %s591 = sor.u32 256, 16
    %592 = vbcast.lane.b32.xlu0 %v581, %s591
    %v593 = vpop.permute.xlu0 %592
    %s595 = sor.u32 256, 24
    %596 = vbcast.lane.b32.xlu0 %v581, %s595
    %v597 = vpop.permute.xlu0 %596
    %v602 = vmul.f32 %v573, %v585
    %v603 = vmul.f32 %v573, %v589
    %v604 = vmul.f32 %v573, %v593
    %v605 = vmul.f32 %v573, %v597
    %v606 = vmul.f32 %v577, %v585
    %v607 = vmul.f32 %v577, %v589
    %v608 = vmul.f32 %v577, %v593
    %v609 = vmul.f32 %v577, %v597
    %v612 = vsel %vm369, %v559, %v552
    %621 = vset.pattern.permute.xlu0 0
    %622 = vperm.xlu0 %621, %v602
    %v623 = vpop.permute.xlu0 %622
    %624 = vset.pattern.permute.xlu0 0
    %625 = vperm.xlu0 %624, %v603
    %v626 = vpop.permute.xlu0 %625
    %627 = vset.pattern.permute.xlu0 0
    %628 = vperm.xlu0 %627, %v604
    %v629 = vpop.permute.xlu0 %628
    %630 = vset.pattern.permute.xlu0 0
    %631 = vperm.xlu0 %630, %v605
    %v632 = vpop.permute.xlu0 %631
    %633 = vset.pattern.permute.xlu0 0
    %634 = vperm.xlu0 %633, %v606
    %v635 = vpop.permute.xlu0 %634
    %636 = vset.pattern.permute.xlu0 0
    %637 = vperm.xlu0 %636, %v607
    %v638 = vpop.permute.xlu0 %637
    %639 = vset.pattern.permute.xlu0 0
    %640 = vperm.xlu0 %639, %v608
    %v641 = vpop.permute.xlu0 %640
    %642 = vset.pattern.permute.xlu0 0
    %643 = vperm.xlu0 %642, %v609
    %v644 = vpop.permute.xlu0 %643
    %v645 = vlaneseq
    %v646 = vshrl.u32 %v645, 7
    %v647 = vsub.s32 %v126, %v646
    %v648 = vrot.slane %v623, %v647
    %v649 = vlaneseq
    %v650 = vshrl.u32 %v649, 7
    %v651 = vsub.s32 %v407, %v650
    %v652 = vrot.slane %v626, %v651
    %v653 = vsel %vm412, %v652, %v648
    %v654 = vlaneseq
    %v655 = vshrl.u32 %v654, 7
    %v656 = vsub.s32 %v414, %v655
    %v657 = vrot.slane %v629, %v656
    %v658 = vsel %vm419, %v657, %v653
    %v659 = vlaneseq
    %v660 = vshrl.u32 %v659, 7
    %v661 = vsub.s32 %v421, %v660
    %v662 = vrot.slane %v632, %v661
    %v663 = vsel %vm426, %v662, %v658
    %v664 = vlaneseq
    %v665 = vshrl.u32 %v664, 7
    %v666 = vsub.s32 %v126, %v665
    %v667 = vrot.slane %v635, %v666
    %v668 = vlaneseq
    %v669 = vshrl.u32 %v668, 7
    %v670 = vsub.s32 %v407, %v669
    %v671 = vrot.slane %v638, %v670
    %v672 = vsel %vm412, %v671, %v667
    %v673 = vlaneseq
    %v674 = vshrl.u32 %v673, 7
    %v675 = vsub.s32 %v414, %v674
    %v676 = vrot.slane %v641, %v675
    %v677 = vsel %vm419, %v676, %v672
    %v678 = vlaneseq
    %v679 = vshrl.u32 %v678, 7
    %v680 = vsub.s32 %v421, %v679
    %v681 = vrot.slane %v644, %v680
    %v682 = vsel %vm426, %v681, %v677
    %v683 = vsel %vm369, %v682, %v663
    %v685 = vsel %vm449, %v612, 0
    %687 = vmatprep.subr.mxu0 0.0
    %688 = vmatpush1.msra.mxu0 %v561
    %689 = vmatprep.subr.mxu0 0.0
    %690 = vmatpush1.msra.mxu0 %v562
    %691 = vmatprep.subr.mxu0 0.0
    %692 = vmatpush1.msra.mxu0 %v563
    %693 = vmatprep.subr.mxu0 0.0
    %694 = vmatpush1.msra.mxu0 %v564
    %695 = vmatprep.subr.mxu0 0.0
    %696 = vmatpush1.msra.mxu0 %v565
    %697 = vmatprep.subr.mxu0 0.0
    %698 = vmatpush1.msra.mxu0 %v566
    %699 = vmatprep.subr.mxu0 0.0
    %700 = vmatpush1.msra.mxu0 %v567
    %701 = vmatprep.subr.mxu0 0.0
    %702 = vmatpush1.msra.mxu0 %v568
    %703 = vmatprep.subr.mxu0 0.0
    %704 = vmatpush1.msra.mxu0 0.0
    %705 = vmatprep.subr.mxu0 0.0
    %706 = vmatpush1.msra.mxu0 0.0
    %707 = vmatprep.subr.mxu0 0.0
    %708 = vmatpush1.msra.mxu0 0.0
    %709 = vmatprep.subr.mxu0 0.0
    %710 = vmatpush1.msra.mxu0 0.0
    %711 = vmatprep.subr.mxu0 0.0
    %712 = vmatpush1.msra.mxu0 0.0
    %713 = vmatprep.subr.mxu0 0.0
    %714 = vmatpush1.msra.mxu0 0.0
    %715 = vmatprep.subr.mxu0 0.0
    %716 = vmatpush1.msra.mxu0 0.0
    %717 = vmatprep.subr.mxu0 0.0
    %718 = vmatpush1.msra.mxu0 0.0
    %719 = vmatprep.subr.mxu0 0.0
    %720 = vmatpush1.msra.mxu0 0.0
    %721 = vmatprep.subr.mxu0 0.0
    %722 = vmatpush1.msra.mxu0 0.0
    %723 = vmatprep.subr.mxu0 0.0
    %724 = vmatpush1.msra.mxu0 0.0
    %725 = vmatprep.subr.mxu0 0.0
    %726 = vmatpush1.msra.mxu0 0.0
    %727 = vmatprep.subr.mxu0 0.0
    %728 = vmatpush1.msra.mxu0 0.0
    %729 = vmatprep.subr.mxu0 0.0
    %730 = vmatpush1.msra.mxu0 0.0
    %731 = vmatprep.subr.mxu0 0.0
    %732 = vmatpush1.msra.mxu0 0.0
    %733 = vmatprep.subr.mxu0 0.0
    %734 = vmatpush1.msra.mxu0 0.0
    %735 = vmatprep.subr.mxu0 0.0
    %736 = vmatpush1.msra.mxu0 0.0
    %737 = vmatprep.subr.mxu0 0.0
    %738 = vmatpush1.msra.mxu0 0.0
    %739 = vmatprep.subr.mxu0 0.0
    %740 = vmatpush1.msra.mxu0 0.0
    %741 = vmatprep.subr.mxu0 0.0
    %742 = vmatpush1.msra.mxu0 0.0
    %743 = vmatprep.subr.mxu0 0.0
    %744 = vmatpush1.msra.mxu0 0.0
    %745 = vmatprep.subr.mxu0 0.0
    %746 = vmatpush1.msra.mxu0 0.0
    %747 = vmatprep.subr.mxu0 0.0
    %748 = vmatpush1.msra.mxu0 0.0
    %749 = vmatprep.subr.mxu0 0.0
    %750 = vmatpush1.msra.mxu0 0.0
    %751 = vmatprep.mubr.f32.mxu0 0.0
    %752 = vmatmul.mubr.f32.gmra.mrb[0].mxu0 %v685
    %v753 = vpop.f32.mrb[0].mxu0
    %v754 = vadd.f32 %v683, %v753
    %v755 = vpop.f32.mrb[0].mxu0
    %756 = vdwg.mxu0
    %758 = vrot.lane.b32.xlu0 %v754, 32
    %v759 = vpop.permute.xlu0 %758
    %vm761 = vcmask 517376
    %762 = vst.msk [vmem:[#allocation2] sm:$0x3] %vm761, %v759
    %v764 = vcombine.high %v273, %v273
    %v766 = vlaneseq
    %v767 = vshrl.u32 %v766, 7
    %v768 = vsub.s32 2, %v767
    %v769 = vrot.slane %v180, %v768
    %771 = vbcast.lane.b32.xlu0 %v769, 256
    %v772 = vpop.permute.xlu0 %771
    %v773 = vlaneseq
    %v774 = vshrl.u32 %v773, 7
    %v775 = vsub.s32 2, %v774
    %v776 = vrot.slane %v275, %v775
    %778 = vbcast.lane.b32.xlu0 %v776, 256
    %v779 = vpop.permute.xlu0 %778
    %v780 = vmul.f32 %v772, %v273
    %v781 = vmul.f32 %v779, %v764
    %v782 = vsel %vm303, %v780, 0.0
    %v783 = vrot.slane %v782, 4
    %v784 = vadd.f32 %v782, %v783
    %v785 = vrot.slane %v784, 2
    %v786 = vadd.f32 %v784, %v785
    %v787 = vrot.slane %v786, 1
    %v788 = vadd.f32 %v786, %v787
    %v789 = vsel %vm303, %v781, 0.0
    %v790 = vrot.slane %v789, 4
    %v791 = vadd.f32 %v789, %v790
    %v792 = vrot.slane %v791, 2
    %v793 = vadd.f32 %v791, %v792
    %v794 = vrot.slane %v793, 1
    %v795 = vadd.f32 %v793, %v794
    %s796 = scalar_lea.vmem %s5, 128
    %v797 = vld [vmem:[%s796] sm:$0xff]
    %v798 = vld [vmem:[%s796 + $0x8] sm:$0xff]
    %v799 = vld [vmem:[%s796 + $0x10] sm:$0xff]
    %v800 = vld [vmem:[%s796 + $0x18] sm:$0xff]
    %v801 = vld [vmem:[%s796 + $0x20] sm:$0xff]
    %v802 = vld [vmem:[%s796 + $0x28] sm:$0xff]
    %v803 = vld [vmem:[%s796 + $0x30] sm:$0xff]
    %v804 = vld [vmem:[%s796 + $0x38] sm:$0xff]
    %v805 = vld [vmem:[%s6 + $0x2] sm:$0x1]
    %v806 = vlaneseq
    %v807 = vshrl.u32 %v806, 7
    %v808 = vsub.s32 2, %v807
    %v809 = vrot.slane %v280, %v808
    %v810 = vlaneseq
    %v811 = vshrl.u32 %v810, 7
    %v812 = vsub.s32 2, %v811
    %v813 = vrot.slane %v283, %v812
    %v814 = vlaneseq
    %v815 = vshrl.u32 %v814, 7
    %v816 = vsub.s32 0, %v815
    %v817 = vrot.slane %v805, %v816
    %820 = vbcast.lane.b32.xlu0 %v817, 256
    %v821 = vpop.permute.xlu0 %820
    %s823 = sor.u32 256, 8
    %824 = vbcast.lane.b32.xlu0 %v817, %s823
    %v825 = vpop.permute.xlu0 %824
    %s827 = sor.u32 256, 16
    %828 = vbcast.lane.b32.xlu0 %v817, %s827
    %v829 = vpop.permute.xlu0 %828
    %s831 = sor.u32 256, 24
    %832 = vbcast.lane.b32.xlu0 %v817, %s831
    %v833 = vpop.permute.xlu0 %832
    %v838 = vmul.f32 %v809, %v821
    %v839 = vmul.f32 %v809, %v825
    %v840 = vmul.f32 %v809, %v829
    %v841 = vmul.f32 %v809, %v833
    %v842 = vmul.f32 %v813, %v821
    %v843 = vmul.f32 %v813, %v825
    %v844 = vmul.f32 %v813, %v829
    %v845 = vmul.f32 %v813, %v833
    %v848 = vsel %vm369, %v795, %v788
    %857 = vset.pattern.permute.xlu0 0
    %858 = vperm.xlu0 %857, %v838
    %v859 = vpop.permute.xlu0 %858
    %860 = vset.pattern.permute.xlu0 0
    %861 = vperm.xlu0 %860, %v839
    %v862 = vpop.permute.xlu0 %861
    %863 = vset.pattern.permute.xlu0 0
    %864 = vperm.xlu0 %863, %v840
    %v865 = vpop.permute.xlu0 %864
    %866 = vset.pattern.permute.xlu0 0
    %867 = vperm.xlu0 %866, %v841
    %v868 = vpop.permute.xlu0 %867
    %869 = vset.pattern.permute.xlu0 0
    %870 = vperm.xlu0 %869, %v842
    %v871 = vpop.permute.xlu0 %870
    %872 = vset.pattern.permute.xlu0 0
    %873 = vperm.xlu0 %872, %v843
    %v874 = vpop.permute.xlu0 %873
    %875 = vset.pattern.permute.xlu0 0
    %876 = vperm.xlu0 %875, %v844
    %v877 = vpop.permute.xlu0 %876
    %878 = vset.pattern.permute.xlu0 0
    %879 = vperm.xlu0 %878, %v845
    %v880 = vpop.permute.xlu0 %879
    %v881 = vlaneseq
    %v882 = vshrl.u32 %v881, 7
    %v883 = vsub.s32 %v126, %v882
    %v884 = vrot.slane %v859, %v883
    %v885 = vlaneseq
    %v886 = vshrl.u32 %v885, 7
    %v887 = vsub.s32 %v407, %v886
    %v888 = vrot.slane %v862, %v887
    %v889 = vsel %vm412, %v888, %v884
    %v890 = vlaneseq
    %v891 = vshrl.u32 %v890, 7
    %v892 = vsub.s32 %v414, %v891
    %v893 = vrot.slane %v865, %v892
    %v894 = vsel %vm419, %v893, %v889
    %v895 = vlaneseq
    %v896 = vshrl.u32 %v895, 7
    %v897 = vsub.s32 %v421, %v896
    %v898 = vrot.slane %v868, %v897
    %v899 = vsel %vm426, %v898, %v894
    %v900 = vlaneseq
    %v901 = vshrl.u32 %v900, 7
    %v902 = vsub.s32 %v126, %v901
    %v903 = vrot.slane %v871, %v902
    %v904 = vlaneseq
    %v905 = vshrl.u32 %v904, 7
    %v906 = vsub.s32 %v407, %v905
    %v907 = vrot.slane %v874, %v906
    %v908 = vsel %vm412, %v907, %v903
    %v909 = vlaneseq
    %v910 = vshrl.u32 %v909, 7
    %v911 = vsub.s32 %v414, %v910
    %v912 = vrot.slane %v877, %v911
    %v913 = vsel %vm419, %v912, %v908
    %v914 = vlaneseq
    %v915 = vshrl.u32 %v914, 7
    %v916 = vsub.s32 %v421, %v915
    %v917 = vrot.slane %v880, %v916
    %v918 = vsel %vm426, %v917, %v913
    %v919 = vsel %vm369, %v918, %v899
    %v921 = vsel %vm449, %v848, 0
    %923 = vmatprep.subr.mxu0 0.0
    %924 = vmatpush1.msra.mxu0 %v797
    %925 = vmatprep.subr.mxu0 0.0
    %926 = vmatpush1.msra.mxu0 %v798
    %927 = vmatprep.subr.mxu0 0.0
    %928 = vmatpush1.msra.mxu0 %v799
    %929 = vmatprep.subr.mxu0 0.0
    %930 = vmatpush1.msra.mxu0 %v800
    %931 = vmatprep.subr.mxu0 0.0
    %932 = vmatpush1.msra.mxu0 %v801
    %933 = vmatprep.subr.mxu0 0.0
    %934 = vmatpush1.msra.mxu0 %v802
    %935 = vmatprep.subr.mxu0 0.0
    %936 = vmatpush1.msra.mxu0 %v803
    %937 = vmatprep.subr.mxu0 0.0
    %938 = vmatpush1.msra.mxu0 %v804
    %939 = vmatprep.subr.mxu0 0.0
    %940 = vmatpush1.msra.mxu0 0.0
    %941 = vmatprep.subr.mxu0 0.0
    %942 = vmatpush1.msra.mxu0 0.0
    %943 = vmatprep.subr.mxu0 0.0
    %944 = vmatpush1.msra.mxu0 0.0
    %945 = vmatprep.subr.mxu0 0.0
    %946 = vmatpush1.msra.mxu0 0.0
    %947 = vmatprep.subr.mxu0 0.0
    %948 = vmatpush1.msra.mxu0 0.0
    %949 = vmatprep.subr.mxu0 0.0
    %950 = vmatpush1.msra.mxu0 0.0
    %951 = vmatprep.subr.mxu0 0.0
    %952 = vmatpush1.msra.mxu0 0.0
    %953 = vmatprep.subr.mxu0 0.0
    %954 = vmatpush1.msra.mxu0 0.0
    %955 = vmatprep.subr.mxu0 0.0
    %956 = vmatpush1.msra.mxu0 0.0
    %957 = vmatprep.subr.mxu0 0.0
    %958 = vmatpush1.msra.mxu0 0.0
    %959 = vmatprep.subr.mxu0 0.0
    %960 = vmatpush1.msra.mxu0 0.0
    %961 = vmatprep.subr.mxu0 0.0
    %962 = vmatpush1.msra.mxu0 0.0
    %963 = vmatprep.subr.mxu0 0.0
    %964 = vmatpush1.msra.mxu0 0.0
    %965 = vmatprep.subr.mxu0 0.0
    %966 = vmatpush1.msra.mxu0 0.0
    %967 = vmatprep.subr.mxu0 0.0
    %968 = vmatpush1.msra.mxu0 0.0
    %969 = vmatprep.subr.mxu0 0.0
    %970 = vmatpush1.msra.mxu0 0.0
    %971 = vmatprep.subr.mxu0 0.0
    %972 = vmatpush1.msra.mxu0 0.0
    %973 = vmatprep.subr.mxu0 0.0
    %974 = vmatpush1.msra.mxu0 0.0
    %975 = vmatprep.subr.mxu0 0.0
    %976 = vmatpush1.msra.mxu0 0.0
    %977 = vmatprep.subr.mxu0 0.0
    %978 = vmatpush1.msra.mxu0 0.0
    %979 = vmatprep.subr.mxu0 0.0
    %980 = vmatpush1.msra.mxu0 0.0
    %981 = vmatprep.subr.mxu0 0.0
    %982 = vmatpush1.msra.mxu0 0.0
    %983 = vmatprep.subr.mxu0 0.0
    %984 = vmatpush1.msra.mxu0 0.0
    %985 = vmatprep.subr.mxu0 0.0
    %986 = vmatpush1.msra.mxu0 0.0
    %987 = vmatprep.mubr.f32.mxu0 0.0
    %988 = vmatmul.mubr.f32.gmra.mrb[0].mxu0 %v921
    %v989 = vpop.f32.mrb[0].mxu0
    %v990 = vadd.f32 %v919, %v989
    %v991 = vpop.f32.mrb[0].mxu0
    %992 = vdwg.mxu0
    %994 = vrot.lane.b32.xlu0 %v990, 64
    %v995 = vpop.permute.xlu0 %994
    %vm997 = vcmask 779776
    %998 = vst.msk [vmem:[#allocation2] sm:$0x3] %vm997, %v995
    %v999 = vlaneseq
    %v1000 = vshrl.u32 %v999, 7
    %v1001 = vsub.s32 3, %v1000
    %v1002 = vrot.slane %v180, %v1001
    %1004 = vbcast.lane.b32.xlu0 %v1002, 256
    %v1005 = vpop.permute.xlu0 %1004
    %v1006 = vlaneseq
    %v1007 = vshrl.u32 %v1006, 7
    %v1008 = vsub.s32 3, %v1007
    %v1009 = vrot.slane %v275, %v1008
    %1011 = vbcast.lane.b32.xlu0 %v1009, 256
    %v1012 = vpop.permute.xlu0 %1011
    %1013 = vrot.lane.b32.xlu0 %v273, 64
    %v1014 = vpop.permute.xlu0 %1013
    %1015 = vrot.lane.b32.xlu0 %v764, 64
    %v1016 = vpop.permute.xlu0 %1015
    %v1019 = vmul.f32 %v1005, %v1014
    %v1020 = vmul.f32 %v1012, %v1016
    %v1021 = vsel %vm303, %v1019, 0.0
    %v1022 = vrot.slane %v1021, 4
    %v1023 = vadd.f32 %v1021, %v1022
    %v1024 = vrot.slane %v1023, 2
    %v1025 = vadd.f32 %v1023, %v1024
    %v1026 = vrot.slane %v1025, 1
    %v1027 = vadd.f32 %v1025, %v1026
    %v1028 = vsel %vm303, %v1020, 0.0
    %v1029 = vrot.slane %v1028, 4
    %v1030 = vadd.f32 %v1028, %v1029
    %v1031 = vrot.slane %v1030, 2
    %v1032 = vadd.f32 %v1030, %v1031
    %v1033 = vrot.slane %v1032, 1
    %v1034 = vadd.f32 %v1032, %v1033
    %s1035 = scalar_lea.vmem %s5, 192
    %v1036 = vld [vmem:[%s1035] sm:$0xff]
    %v1037 = vld [vmem:[%s1035 + $0x8] sm:$0xff]
    %v1038 = vld [vmem:[%s1035 + $0x10] sm:$0xff]
    %v1039 = vld [vmem:[%s1035 + $0x18] sm:$0xff]
    %v1040 = vld [vmem:[%s1035 + $0x20] sm:$0xff]
    %v1041 = vld [vmem:[%s1035 + $0x28] sm:$0xff]
    %v1042 = vld [vmem:[%s1035 + $0x30] sm:$0xff]
    %v1043 = vld [vmem:[%s1035 + $0x38] sm:$0xff]
    %v1044 = vld [vmem:[%s6 + $0x3] sm:$0x1]
    %v1045 = vlaneseq
    %v1046 = vshrl.u32 %v1045, 7
    %v1047 = vsub.s32 3, %v1046
    %v1048 = vrot.slane %v280, %v1047
    %v1049 = vlaneseq
    %v1050 = vshrl.u32 %v1049, 7
    %v1051 = vsub.s32 3, %v1050
    %v1052 = vrot.slane %v283, %v1051
    %v1053 = vlaneseq
    %v1054 = vshrl.u32 %v1053, 7
    %v1055 = vsub.s32 0, %v1054
    %v1056 = vrot.slane %v1044, %v1055
    %1059 = vbcast.lane.b32.xlu0 %v1056, 256
    %v1060 = vpop.permute.xlu0 %1059
    %s1062 = sor.u32 256, 8
    %1063 = vbcast.lane.b32.xlu0 %v1056, %s1062
    %v1064 = vpop.permute.xlu0 %1063
    %s1066 = sor.u32 256, 16
    %1067 = vbcast.lane.b32.xlu0 %v1056, %s1066
    %v1068 = vpop.permute.xlu0 %1067
    %s1070 = sor.u32 256, 24
    %1071 = vbcast.lane.b32.xlu0 %v1056, %s1070
    %v1072 = vpop.permute.xlu0 %1071
    %v1077 = vmul.f32 %v1048, %v1060
    %v1078 = vmul.f32 %v1048, %v1064
    %v1079 = vmul.f32 %v1048, %v1068
    %v1080 = vmul.f32 %v1048, %v1072
    %v1081 = vmul.f32 %v1052, %v1060
    %v1082 = vmul.f32 %v1052, %v1064
    %v1083 = vmul.f32 %v1052, %v1068
    %v1084 = vmul.f32 %v1052, %v1072
    %v1087 = vsel %vm369, %v1034, %v1027
    %1096 = vset.pattern.permute.xlu0 0
    %1097 = vperm.xlu0 %1096, %v1077
    %v1098 = vpop.permute.xlu0 %1097
    %1099 = vset.pattern.permute.xlu0 0
    %1100 = vperm.xlu0 %1099, %v1078
    %v1101 = vpop.permute.xlu0 %1100
    %1102 = vset.pattern.permute.xlu0 0
    %1103 = vperm.xlu0 %1102, %v1079
    %v1104 = vpop.permute.xlu0 %1103
    %1105 = vset.pattern.permute.xlu0 0
    %1106 = vperm.xlu0 %1105, %v1080
    %v1107 = vpop.permute.xlu0 %1106
    %1108 = vset.pattern.permute.xlu0 0
    %1109 = vperm.xlu0 %1108, %v1081
    %v1110 = vpop.permute.xlu0 %1109
    %1111 = vset.pattern.permute.xlu0 0
    %1112 = vperm.xlu0 %1111, %v1082
    %v1113 = vpop.permute.xlu0 %1112
    %1114 = vset.pattern.permute.xlu0 0
    %1115 = vperm.xlu0 %1114, %v1083
    %v1116 = vpop.permute.xlu0 %1115
    %1117 = vset.pattern.permute.xlu0 0
    %1118 = vperm.xlu0 %1117, %v1084
    %v1119 = vpop.permute.xlu0 %1118
    %v1120 = vlaneseq
    %v1121 = vshrl.u32 %v1120, 7
    %v1122 = vsub.s32 %v126, %v1121
    %v1123 = vrot.slane %v1098, %v1122
    %v1124 = vlaneseq
    %v1125 = vshrl.u32 %v1124, 7
    %v1126 = vsub.s32 %v407, %v1125
    %v1127 = vrot.slane %v1101, %v1126
    %v1128 = vsel %vm412, %v1127, %v1123
    %v1129 = vlaneseq
    %v1130 = vshrl.u32 %v1129, 7
    %v1131 = vsub.s32 %v414, %v1130
    %v1132 = vrot.slane %v1104, %v1131
    %v1133 = vsel %vm419, %v1132, %v1128
    %v1134 = vlaneseq
    %v1135 = vshrl.u32 %v1134, 7
    %v1136 = vsub.s32 %v421, %v1135
    %v1137 = vrot.slane %v1107, %v1136
    %v1138 = vsel %vm426, %v1137, %v1133
    %v1139 = vlaneseq
    %v1140 = vshrl.u32 %v1139, 7
    %v1141 = vsub.s32 %v126, %v1140
    %v1142 = vrot.slane %v1110, %v1141
    %v1143 = vlaneseq
    %v1144 = vshrl.u32 %v1143, 7
    %v1145 = vsub.s32 %v407, %v1144
    %v1146 = vrot.slane %v1113, %v1145
    %v1147 = vsel %vm412, %v1146, %v1142
    %v1148 = vlaneseq
    %v1149 = vshrl.u32 %v1148, 7
    %v1150 = vsub.s32 %v414, %v1149
    %v1151 = vrot.slane %v1116, %v1150
    %v1152 = vsel %vm419, %v1151, %v1147
    %v1153 = vlaneseq
    %v1154 = vshrl.u32 %v1153, 7
    %v1155 = vsub.s32 %v421, %v1154
    %v1156 = vrot.slane %v1119, %v1155
    %v1157 = vsel %vm426, %v1156, %v1152
    %v1158 = vsel %vm369, %v1157, %v1138
    %v1160 = vsel %vm449, %v1087, 0
    %1162 = vmatprep.subr.mxu0 0.0
    %1163 = vmatpush1.msra.mxu0 %v1036
    %1164 = vmatprep.subr.mxu0 0.0
    %1165 = vmatpush1.msra.mxu0 %v1037
    %1166 = vmatprep.subr.mxu0 0.0
    %1167 = vmatpush1.msra.mxu0 %v1038
    %1168 = vmatprep.subr.mxu0 0.0
    %1169 = vmatpush1.msra.mxu0 %v1039
    %1170 = vmatprep.subr.mxu0 0.0
    %1171 = vmatpush1.msra.mxu0 %v1040
    %1172 = vmatprep.subr.mxu0 0.0
    %1173 = vmatpush1.msra.mxu0 %v1041
    %1174 = vmatprep.subr.mxu0 0.0
    %1175 = vmatpush1.msra.mxu0 %v1042
    %1176 = vmatprep.subr.mxu0 0.0
    %1177 = vmatpush1.msra.mxu0 %v1043
    %1178 = vmatprep.subr.mxu0 0.0
    %1179 = vmatpush1.msra.mxu0 0.0
    %1180 = vmatprep.subr.mxu0 0.0
    %1181 = vmatpush1.msra.mxu0 0.0
    %1182 = vmatprep.subr.mxu0 0.0
    %1183 = vmatpush1.msra.mxu0 0.0
    %1184 = vmatprep.subr.mxu0 0.0
    %1185 = vmatpush1.msra.mxu0 0.0
    %1186 = vmatprep.subr.mxu0 0.0
    %1187 = vmatpush1.msra.mxu0 0.0
    %1188 = vmatprep.subr.mxu0 0.0
    %1189 = vmatpush1.msra.mxu0 0.0
    %1190 = vmatprep.subr.mxu0 0.0
    %1191 = vmatpush1.msra.mxu0 0.0
    %1192 = vmatprep.subr.mxu0 0.0
    %1193 = vmatpush1.msra.mxu0 0.0
    %1194 = vmatprep.subr.mxu0 0.0
    %1195 = vmatpush1.msra.mxu0 0.0
    %1196 = vmatprep.subr.mxu0 0.0
    %1197 = vmatpush1.msra.mxu0 0.0
    %1198 = vmatprep.subr.mxu0 0.0
    %1199 = vmatpush1.msra.mxu0 0.0
    %1200 = vmatprep.subr.mxu0 0.0
    %1201 = vmatpush1.msra.mxu0 0.0
    %1202 = vmatprep.subr.mxu0 0.0
    %1203 = vmatpush1.msra.mxu0 0.0
    %1204 = vmatprep.subr.mxu0 0.0
    %1205 = vmatpush1.msra.mxu0 0.0
    %1206 = vmatprep.subr.mxu0 0.0
    %1207 = vmatpush1.msra.mxu0 0.0
    %1208 = vmatprep.subr.mxu0 0.0
    %1209 = vmatpush1.msra.mxu0 0.0
    %1210 = vmatprep.subr.mxu0 0.0
    %1211 = vmatpush1.msra.mxu0 0.0
    %1212 = vmatprep.subr.mxu0 0.0
    %1213 = vmatpush1.msra.mxu0 0.0
    %1214 = vmatprep.subr.mxu0 0.0
    %1215 = vmatpush1.msra.mxu0 0.0
    %1216 = vmatprep.subr.mxu0 0.0
    %1217 = vmatpush1.msra.mxu0 0.0
    %1218 = vmatprep.subr.mxu0 0.0
    %1219 = vmatpush1.msra.mxu0 0.0
    %1220 = vmatprep.subr.mxu0 0.0
    %1221 = vmatpush1.msra.mxu0 0.0
    %1222 = vmatprep.subr.mxu0 0.0
    %1223 = vmatpush1.msra.mxu0 0.0
    %1224 = vmatprep.subr.mxu0 0.0
    %1225 = vmatpush1.msra.mxu0 0.0
    %1226 = vmatprep.mubr.f32.mxu0 0.0
    %1227 = vmatmul.mubr.f32.gmra.mrb[0].mxu0 %v1160
    %v1228 = vpop.f32.mrb[0].mxu0
    %v1229 = vadd.f32 %v1158, %v1228
    %v1230 = vpop.f32.mrb[0].mxu0
    %1231 = vdwg.mxu0
    %1233 = vrot.lane.b32.xlu0 %v1229, 96
    %v1234 = vpop.permute.xlu0 %1233
    %vm1236 = vcmask 1042176
    %1237 = vst.msk [vmem:[#allocation2] sm:$0x3] %vm1236, %v1234
    // Predicated region
    $region30: #{tpu_custom_call.1} parent=1 // pred_check
      _
    $region31: #{tpu_custom_call.1} parent=1 // pred_check_branch
      %1239 = sbr.rel (0) target = $region33
    $region32: #{tpu_custom_call.1} parent=1 // pred_region
      %s1241 = ssub.s32 32, 32
      %1242 = vsyncadd [#allocation3], %s1241
      %s1244 = sshll.u32 [#allocation2], 4
      %s1245 = int_to_ptr.vmem [resolvable:$true] %s1244
      %1247 = dma.vmem_to_hbm [thread:$0]  %s1245, 32, %s7, [#allocation3]
    $region33: #{tpu_custom_call.1} parent=1 // pred_fallthru
      _
    // Predicated region
    $region34: #{tpu_custom_call.1} parent=1 // pred_check
      _
    $region35: #{tpu_custom_call.1} parent=1 // pred_check_branch
      %1249 = sbr.rel (0) target = $region37
    $region36: #{tpu_custom_call.1} parent=1 // pred_region
      %1250 = dma.done [#allocation3], 32
    $region37: #{tpu_custom_call.1} parent=1 // pred_fallthru
      _
    %1251 = vsyncpa [#allocation3], 1

</llo_original>
